<compile_context>
chip_gen: v7x
topology: tpu7x:2x2x1
jax: 0.10.0
libtpu: 0.0.40
codegen_flags: <defaults>
</compile_context>

<pallas_src>
import jax
import jax.numpy as jnp
from jax.experimental import pallas as pl
from jax.experimental.pallas import tpu as pltpu

C_CONST = 1.0
MAX_M = 0.5

# SMEM scratch slots
_T_POS, _T_NEG, _N_POS, _MX_POS, _MX_NEG, _L1, _L2 = range(7)


def _round_up(x, m):
    return (x + m - 1) // m * m


def _cdiv(a, b):
    return -(-a // b)


def _vmem_usable_bytes():
    # ~3/4 of physical VMEM (v5e/v6e: 128 MiB, v7x: 64 MiB), leaving headroom
    # for Mosaic internals. Fall back to the smallest generation if the
    # trace-time query is unavailable.
    try:
        cap = int(pltpu.get_tpu_info().vmem_capacity_bytes)
    except Exception:
        cap = 64 * 1024 * 1024
    return (cap * 3) // 4


def _make_kernel(batch, k_true, k_pad, tb, nb, use_cache, mask_rows, mask_cols):
    B, K, TB, NB = batch, k_pad, tb, nb

    def masks(labels, i):
        """Positive / negative masks restricted to real (row, column) slots."""
        pos = labels
        neg = 1.0 - labels
        if mask_rows:                              # compiled out when B % TB == 0
            row = jax.lax.broadcasted_iota(jnp.int32, (TB, 1), 0) + i * TB
            rvalid = (row < B).astype(jnp.float32)
            pos = pos * rvalid
            neg = neg * rvalid
        if mask_cols:                              # compiled out when K % 128 == 0
            col = jax.lax.broadcasted_iota(jnp.int32, (1, K), 1)
            cvalid = (col < k_true).astype(jnp.float32)
            pos = pos * cvalid
            neg = neg * cvalid
        return pos, neg

    def kernel(logits_ref, labels_ref, margin_ref, out_ref, stats, *cache):
        p = pl.program_id(0)      # phase: 0 = global reductions, 1 = loss terms
        i = pl.program_id(1)      # batch tile
        m = margin_ref[...]       # [1, K]  C * counts**-0.25 (0 in padded cols)

        @pl.when(jnp.logical_and(p == 0, i == 0))
        def _init():
            for k in range(7):
                stats[k] = jnp.float32(0.0)

        @pl.when(p == 0)
        def _phase0():
            # Upcast AFTER the load so callers can feed bf16 logits / bf16-int8
            # labels and pay half the HBM traffic.
            logits = logits_ref[...].astype(jnp.float32)
            labels = labels_ref[...].astype(jnp.float32)
            pos_m, neg_m = masks(labels, i)
            sig = jax.nn.sigmoid(logits)
            sig_pos = sig * pos_m
            sig_neg = sig * neg_m
            stats[_T_POS] = stats[_T_POS] + jnp.sum(sig_pos)
            stats[_T_NEG] = stats[_T_NEG] + jnp.sum(sig_neg)
            stats[_N_POS] = stats[_N_POS] + jnp.sum(pos_m)
            stats[_MX_POS] = jnp.maximum(stats[_MX_POS], jnp.max(m * pos_m))
            stats[_MX_NEG] = jnp.maximum(stats[_MX_NEG], jnp.max(m * neg_m))
            if use_cache:
                # Fold the label into the sign bit (sigmoid > 0 for finite
                # logits): positives -> -sig, negatives -> +sig, padding -> 0.
                cache[0][i] = sig_neg - sig_pos

        @pl.when(p == 1)
        def _phase1():
            if use_cache:
                x = cache[0][i]                    # on-chip, no HBM re-read
                is_pos = x < 0.0
                is_neg = x > 0.0
                sig = jnp.abs(x)
            else:
                logits = logits_ref[...].astype(jnp.float32)
                labels = labels_ref[...].astype(jnp.float32)
                pos_m, neg_m = masks(labels, i)
                sig = jax.nn.sigmoid(logits)
                is_pos = pos_m > 0.0
                is_neg = neg_m > 0.0

            sig_pos = jnp.where(is_pos, sig, 0.0)
            sig_neg = jnp.where(is_neg, sig, 0.0)

            t_pos = stats[_T_POS]
            t_neg = stats[_T_NEG]
            scale_pos = MAX_M / stats[_MX_POS]
            scale_neg = MAX_M / stats[_MX_NEG]

            s_pos_row = jnp.sum(sig_pos, axis=-1, keepdims=True)   # [TB, 1]
            s_neg_row = jnp.sum(sig_neg, axis=-1, keepdims=True)   # [TB, 1]

            # At an active position the score is simply sig; only the margin
            # scale and the "rest of the denominator" differ between the two
            # parts, so one exp and one log(denom) serve both parts.
            delta = m * jnp.where(is_pos, scale_pos, scale_neg)
            rest = jnp.where(is_pos, s_neg_row + t_pos, s_pos_row + t_neg) - sig
            z = sig - delta
            denom = jnp.exp(z) + rest
            log_denom = jnp.log(denom)

            #   -log(q)     = log(denom) - z                 (part 1, positives)
            #   -log(1 - q) = log(denom) - log(denom - e^z)  (part 2, negatives)
            rest_safe = jnp.where(is_neg, rest, 1.0)
            term1 = jnp.where(is_pos, log_denom - z, 0.0)
            term2 = jnp.where(is_neg, log_denom - jnp.log(rest_safe), 0.0)

            stats[_L1] = stats[_L1] + jnp.sum(term1)
            stats[_L2] = stats[_L2] + jnp.sum(term2)

            @pl.when(i == NB - 1)
            def _finalize():
                n_pos = stats[_N_POS]
                n_neg = jnp.float32(batch * k_true) - n_pos
                # NOTE: like the reference, this yields NaN/Inf if one part has
                # no active positions (all-zero or all-one labels).
                out_ref[0] = stats[_L1] / n_pos + stats[_L2] / n_neg

    return kernel


def ldam_loss_old(logits, labels, class_counts, *, block_b=None, use_cache=None):
    assert logits.shape == labels.shape, "Shape mismatch"
    B, K = logits.shape
    assert class_counts.shape[-1] == K, "Mismatch in counts/logits/labels shapes"

    b_log = jnp.dtype(logits.dtype).itemsize
    b_lab = jnp.dtype(labels.dtype).itemsize
    # Sublane granularity so packed sub-32-bit tiles stay aligned:
    # f32 -> 8, bf16 -> 16, int8/bool -> 32.
    gran = max(8 * (4 // b_log), 8 * (4 // b_lab), 8)
    K_pad = _round_up(K, 128)

    usable = _vmem_usable_bytes()

    # --- batch tile: target ~16 MiB of double-buffered streamed inputs -------
    if block_b is not None:
        TB = min(_round_up(block_b, gran), _round_up(B, gran))
    else:
        target = min(16 * 1024 * 1024, usable // 3)
        per_row = 2 * K_pad * (b_log + b_lab)          # 2 pipeline bufs / input
        nb_guess = max(1, _cdiv(B, max(gran, target // per_row)))
        TB = _round_up(_cdiv(B, nb_guess), gran)
    nb = _cdiv(B, TB)
    B_pad = nb * TB

    # --- VMEM budget: streamed buffers (+ optional signed-sigmoid cache) -----
    stream_bytes = 2 * TB * K_pad * (b_log + b_lab) + 2 * K_pad * 4
    cache_bytes = nb * TB * K_pad * 4                  # f32 cache for exactness
    if use_cache is None:
        use_cache = stream_bytes + cache_bytes + (4 << 20) <= usable
    need = stream_bytes + (cache_bytes if use_cache else 0)
    vmem_limit = int(min(usable, max(need + (4 << 20), 16 << 20)))

    # --- pad inputs with zeros (masked out inside the kernel) ----------------
    if B_pad != B or K_pad != K:
        pad = ((0, B_pad - B), (0, K_pad - K))
        logits = jnp.pad(logits, pad)
        labels = jnp.pad(labels, pad)
    # TODO(synk): handle the ragged row tail fully in-kernel (NaN-safe where
    # masking on an uneven last block) to avoid the jnp.pad copy when
    # B % TB != 0.

    # Per-class LDAM margin C * counts**-0.25 computed once on a tiny [K]
    # vector (rsqrt(sqrt(x)) == x**-0.25; avoids pow -> exp(log(x)*p)).
    margin = (C_CONST * jax.lax.rsqrt(jnp.sqrt(class_counts.astype(jnp.float32)))
              ).reshape(1, K)
    if K_pad != K:
        margin = jnp.pad(margin, ((0, 0), (0, K_pad - K)))

    kernel = _make_kernel(B, K, K_pad, TB, nb, use_cache,
                          mask_rows=(B_pad != B), mask_cols=(K_pad != K))

    if use_cache:
        # Phase 1 reads the on-chip cache; pin the streamed inputs to block 0
        # so logits/labels are DMA'd from HBM only once (phase 0).
        in_idx = lambda p, i: ((1 - p) * i, 0)
        scratch = [pltpu.SMEM((8,), jnp.float32),
                   pltpu.VMEM((nb, TB, K_pad), jnp.float32)]
    else:
        in_idx = lambda p, i: (i, 0)
        scratch = [pltpu.SMEM((8,), jnp.float32)]

    out = pl.pallas_call(
        kernel,
        out_shape=jax.ShapeDtypeStruct((1,), jnp.float32),
        grid=(2, nb),
        in_specs=[
            pl.BlockSpec((TB, K_pad), in_idx),                 # logits
            pl.BlockSpec((TB, K_pad), in_idx),                 # labels
            pl.BlockSpec((1, K_pad), lambda p, i: (0, 0)),     # per-class margins
        ],
        # Scalar loss accumulates in SMEM scratch; the result is an SMEM scalar
        # output written once at the last grid step (no masked 1-lane vst).
        out_specs=pl.BlockSpec(memory_space=pltpu.MemorySpace.SMEM),
        scratch_shapes=scratch,
        compiler_params=pltpu.CompilerParams(
            # Phase 1 depends on phase 0's SMEM accumulators -> sequential.
            # TODO(synk): v7x (2 TCs): emit per-tile partial sums to a
            # lane-dense VMEM output with a "parallel" batch axis plus a tiny
            # JAX epilogue for ~2x.
            dimension_semantics=("arbitrary", "arbitrary"),
            vmem_limit_bytes=vmem_limit),
    )(logits, labels, margin)
    return out[0]


def _reference(logits, labels, class_counts):
    # Pure-JAX reference of the dense masked formulation of the torch math.
    sig = jax.nn.sigmoid(logits.astype(jnp.float32))
    labels = labels.astype(jnp.float32)
    counts = class_counts.reshape(1, -1).astype(jnp.float32)

    def part(lbl, one_minus):
        pos_s = sig * lbl
        delta = (C_CONST / counts ** 0.25) * lbl
        delta = delta * (MAX_M / jnp.max(delta))
        neg_sum = jnp.sum(sig * (1.0 - lbl), axis=-1, keepdims=True)
        total_pos = jnp.sum(pos_s)
        num = jnp.exp(pos_s - delta)
        denom = num + neg_sum + total_pos - pos_s
        q = num / denom
        val = 1.0 - q if one_minus else q
        return jnp.sum(-jnp.log(val) * lbl) / jnp.sum(lbl)

    return part(labels, False) + part(1.0 - labels, True)


def _check(loss, ref):
    assert jnp.allclose(loss, ref, rtol=3e-4, atol=1e-5), (loss, ref)


if __name__ == "__main__":
    key = jax.random.PRNGKey(0)
    ks = jax.random.split(key, 9)

    # Case 1: single tile, adaptive TB, VMEM sigmoid-cache path.
    B, K = 8, 128
    logits = jax.random.normal(ks[0], (B, K), dtype=jnp.float32) * 2.0
    labels = (jax.random.uniform(ks[1], (B, K)) < 0.3).astype(jnp.float32)
    counts = jax.random.randint(ks[2], (K,), 1, 1000).astype(jnp.float32)
    loss = ldam_loss_old(logits, labels, counts)
    jax.block_until_ready(loss)
    _check(loss, _reference(logits, labels, counts))

    # Case 2: multiple batch tiles + padded tail, streaming (no-cache) path.
    B2 = 20
    logits2 = jax.random.normal(ks[3], (B2, K), dtype=jnp.float32) * 2.0
    labels2 = (jax.random.uniform(ks[4], (B2, K)) < 0.3).astype(jnp.float32)
    loss2 = ldam_loss_old(logits2, labels2, counts, block_b=8, use_cache=False)
    jax.block_until_ready(loss2)
    _check(loss2, _reference(logits2, labels2, counts))

    # Case 3: multiple batch tiles + padded tail, cache path (dynamic tile idx).
    B3 = 40
    logits3 = jax.random.normal(ks[5], (B3, K), dtype=jnp.float32) * 2.0
    labels3 = (jax.random.uniform(ks[6], (B3, K)) < 0.3).astype(jnp.float32)
    loss3 = ldam_loss_old(logits3, labels3, counts, block_b=16)
    jax.block_until_ready(loss3)
    _check(loss3, _reference(logits3, labels3, counts))

    # Case 4: bf16 inputs (half HBM traffic) + K not a multiple of 128.
    B4, K4 = 24, 130
    logits4 = (jax.random.normal(ks[7], (B4, K4), dtype=jnp.float32) * 2.0
               ).astype(jnp.bfloat16)
    labels4 = (jax.random.uniform(ks[8], (B4, K4)) < 0.3).astype(jnp.bfloat16)
    counts4 = jax.random.randint(ks[2], (K4,), 1, 1000).astype(jnp.float32)
    loss4 = ldam_loss_old(logits4, labels4, counts4)
    jax.block_until_ready(loss4)
    _check(loss4, _reference(logits4, labels4, counts4))

    print("KERNEL_OK")
</pallas_src>

<mosaic_0001>
module attributes {stable_mosaic.version = 11 : i64} {
  func.func @kernel(%arg0: i32, %arg1: i32, %arg2: memref<8x128xf32, #tpu.memory_space<vmem>>, %arg3: memref<8x128xf32, #tpu.memory_space<vmem>>, %arg4: memref<1x128xf32, #tpu.memory_space<vmem>>, %arg5: memref<1xf32, #tpu.memory_space<smem>>, %arg6: memref<8xf32, #tpu.memory_space<smem>>, %arg7: memref<1x8x128xf32, #tpu.memory_space<vmem>>) attributes {dimension_semantics = [#tpu.dimension_semantics<arbitrary>, #tpu.dimension_semantics<arbitrary>], iteration_bounds = array<i64: 2, 1>, scalar_prefetch = 0 : i64, scratch_operands = 2 : i64, tpu.core_type = #tpu.core_type<tc>, window_params = [{transform_indices = @transform_0, window_bounds = array<i64: 8, 128>}, {transform_indices = @transform_1, window_bounds = array<i64: 8, 128>}, {pipeline_mode = #tpu.pipeline_mode<synchronous>, transform_indices = @transform_2, window_bounds = array<i64: 1, 128>}, {transform_indices = @transform_3, window_bounds = array<i64: 1>}]} {
    %c0 = arith.constant 0 : index
    %c0_0 = arith.constant 0 : index
    %0 = vector.load %arg4[%c0, %c0_0] : memref<1x128xf32, #tpu.memory_space<vmem>>, vector<1x128xf32>
    %c0_i32 = arith.constant 0 : i32
    %1 = arith.cmpi eq, %arg0, %c0_i32 : i32
    %c0_i32_1 = arith.constant 0 : i32
    %2 = arith.cmpi eq, %arg1, %c0_i32_1 : i32
    %3 = arith.andi %1, %2 : i1
    %4 = arith.extui %3 : i1 to i32
    %c0_i32_2 = arith.constant 0 : i32
    %5 = arith.cmpi ne, %4, %c0_i32_2 : i32
    scf.if %5 {
      %cst = arith.constant 0.000000e+00 : f32
      %c0_6 = arith.constant 0 : index
      %12 = memref.load %arg6[%c0_6] : memref<8xf32, #tpu.memory_space<smem>>
      memref.store %cst, %arg6[%c0_6] : memref<8xf32, #tpu.memory_space<smem>>
      %cst_7 = arith.constant 0.000000e+00 : f32
      %c1 = arith.constant 1 : index
      %13 = memref.load %arg6[%c1] : memref<8xf32, #tpu.memory_space<smem>>
      memref.store %cst_7, %arg6[%c1] : memref<8xf32, #tpu.memory_space<smem>>
      %cst_8 = arith.constant 0.000000e+00 : f32
      %c2 = arith.constant 2 : index
      %14 = memref.load %arg6[%c2] : memref<8xf32, #tpu.memory_space<smem>>
      memref.store %cst_8, %arg6[%c2] : memref<8xf32, #tpu.memory_space<smem>>
      %cst_9 = arith.constant 0.000000e+00 : f32
      %c3 = arith.constant 3 : index
      %15 = memref.load %arg6[%c3] : memref<8xf32, #tpu.memory_space<smem>>
      memref.store %cst_9, %arg6[%c3] : memref<8xf32, #tpu.memory_space<smem>>
      %cst_10 = arith.constant 0.000000e+00 : f32
      %c4 = arith.constant 4 : index
      %16 = memref.load %arg6[%c4] : memref<8xf32, #tpu.memory_space<smem>>
      memref.store %cst_10, %arg6[%c4] : memref<8xf32, #tpu.memory_space<smem>>
      %cst_11 = arith.constant 0.000000e+00 : f32
      %c5 = arith.constant 5 : index
      %17 = memref.load %arg6[%c5] : memref<8xf32, #tpu.memory_space<smem>>
      memref.store %cst_11, %arg6[%c5] : memref<8xf32, #tpu.memory_space<smem>>
      %cst_12 = arith.constant 0.000000e+00 : f32
      %c6 = arith.constant 6 : index
      %18 = memref.load %arg6[%c6] : memref<8xf32, #tpu.memory_space<smem>>
      memref.store %cst_12, %arg6[%c6] : memref<8xf32, #tpu.memory_space<smem>>
    } else {
    }
    %c0_i32_3 = arith.constant 0 : i32
    %6 = arith.cmpi eq, %arg0, %c0_i32_3 : i32
    %7 = arith.extui %6 : i1 to i32
    %c0_i32_4 = arith.constant 0 : i32
    %8 = arith.cmpi ne, %7, %c0_i32_4 : i32
    scf.if %8 {
      %c0_6 = arith.constant 0 : index
      %c0_7 = arith.constant 0 : index
      %12 = vector.load %arg2[%c0_6, %c0_7] : memref<8x128xf32, #tpu.memory_space<vmem>>, vector<8x128xf32>
      %c0_8 = arith.constant 0 : index
      %c0_9 = arith.constant 0 : index
      %13 = vector.load %arg3[%c0_8, %c0_9] : memref<8x128xf32, #tpu.memory_space<vmem>>, vector<8x128xf32>
      %cst = arith.constant 1.000000e+00 : f32
      %14 = vector.broadcast %cst : f32 to vector<8x128xf32>
      %15 = arith.subf %14, %13 : vector<8x128xf32>
      %16 = arith.negf %12 : vector<8x128xf32>
      %17 = math.exp %16 : vector<8x128xf32>
      %cst_10 = arith.constant 1.000000e+00 : f32
      %18 = vector.broadcast %cst_10 : f32 to vector<8x128xf32>
      %19 = arith.addf %18, %17 : vector<8x128xf32>
      %20 = arith.divf %18, %19 : vector<8x128xf32>
      %21 = arith.mulf %20, %13 : vector<8x128xf32>
      %22 = arith.mulf %20, %15 : vector<8x128xf32>
      %c0_11 = arith.constant 0 : index
      %23 = memref.load %arg6[%c0_11] : memref<8xf32, #tpu.memory_space<smem>>
      %24 = vector.shape_cast %21 : vector<8x128xf32> to vector<1x8x128xf32>
      %cst_12 = arith.constant dense<0.000000e+00> : vector<1xf32>
      %25 = vector.multi_reduction <add>, %24, %cst_12 [1, 2] : vector<1x8x128xf32> to vector<1xf32>
      %26 = vector.shape_cast %25 : vector<1xf32> to vector<1x1x1xf32>
      %27 = vector.extract %26[0, 0, 0] : f32 from vector<1x1x1xf32>
      %28 = arith.addf %23, %27 : f32
      %c0_13 = arith.constant 0 : index
      %29 = memref.load %arg6[%c0_13] : memref<8xf32, #tpu.memory_space<smem>>
      memref.store %28, %arg6[%c0_13] : memref<8xf32, #tpu.memory_space<smem>>
      %c1 = arith.constant 1 : index
      %30 = memref.load %arg6[%c1] : memref<8xf32, #tpu.memory_space<smem>>
      %31 = vector.shape_cast %22 : vector<8x128xf32> to vector<1x8x128xf32>
      %cst_14 = arith.constant dense<0.000000e+00> : vector<1xf32>
      %32 = vector.multi_reduction <add>, %31, %cst_14 [1, 2] : vector<1x8x128xf32> to vector<1xf32>
      %33 = vector.shape_cast %32 : vector<1xf32> to vector<1x1x1xf32>
      %34 = vector.extract %33[0, 0, 0] : f32 from vector<1x1x1xf32>
      %35 = arith.addf %30, %34 : f32
      %c1_15 = arith.constant 1 : index
      %36 = memref.load %arg6[%c1_15] : memref<8xf32, #tpu.memory_space<smem>>
      memref.store %35, %arg6[%c1_15] : memref<8xf32, #tpu.memory_space<smem>>
      %c2 = arith.constant 2 : index
      %37 = memref.load %arg6[%c2] : memref<8xf32, #tpu.memory_space<smem>>
      %38 = vector.shape_cast %13 : vector<8x128xf32> to vector<1x8x128xf32>
      %cst_16 = arith.constant dense<0.000000e+00> : vector<1xf32>
      %39 = vector.multi_reduction <add>, %38, %cst_16 [1, 2] : vector<1x8x128xf32> to vector<1xf32>
      %40 = vector.shape_cast %39 : vector<1xf32> to vector<1x1x1xf32>
      %41 = vector.extract %40[0, 0, 0] : f32 from vector<1x1x1xf32>
      %42 = arith.addf %37, %41 : f32
      %c2_17 = arith.constant 2 : index
      %43 = memref.load %arg6[%c2_17] : memref<8xf32, #tpu.memory_space<smem>>
      memref.store %42, %arg6[%c2_17] : memref<8xf32, #tpu.memory_space<smem>>
      %c3 = arith.constant 3 : index
      %44 = memref.load %arg6[%c3] : memref<8xf32, #tpu.memory_space<smem>>
      %45 = vector.broadcast %0 : vector<1x128xf32> to vector<8x128xf32>
      %46 = arith.mulf %45, %13 : vector<8x128xf32>
      %47 = vector.shape_cast %46 : vector<8x128xf32> to vector<1x8x128xf32>
      %cst_18 = arith.constant dense<0xFF800000> : vector<1xf32>
      %48 = vector.multi_reduction <maximumf>, %47, %cst_18 [1, 2] : vector<1x8x128xf32> to vector<1xf32>
      %49 = vector.shape_cast %48 : vector<1xf32> to vector<1x1x1xf32>
      %50 = vector.extract %49[0, 0, 0] : f32 from vector<1x1x1xf32>
      %51 = arith.maximumf %44, %50 : f32
      %c3_19 = arith.constant 3 : index
      %52 = memref.load %arg6[%c3_19] : memref<8xf32, #tpu.memory_space<smem>>
      memref.store %51, %arg6[%c3_19] : memref<8xf32, #tpu.memory_space<smem>>
      %c4 = arith.constant 4 : index
      %53 = memref.load %arg6[%c4] : memref<8xf32, #tpu.memory_space<smem>>
      %54 = vector.broadcast %0 : vector<1x128xf32> to vector<8x128xf32>
      %55 = arith.mulf %54, %15 : vector<8x128xf32>
      %56 = vector.shape_cast %55 : vector<8x128xf32> to vector<1x8x128xf32>
      %cst_20 = arith.constant dense<0xFF800000> : vector<1xf32>
      %57 = vector.multi_reduction <maximumf>, %56, %cst_20 [1, 2] : vector<1x8x128xf32> to vector<1xf32>
      %58 = vector.shape_cast %57 : vector<1xf32> to vector<1x1x1xf32>
      %59 = vector.extract %58[0, 0, 0] : f32 from vector<1x1x1xf32>
      %60 = arith.maximumf %53, %59 : f32
      %c4_21 = arith.constant 4 : index
      %61 = memref.load %arg6[%c4_21] : memref<8xf32, #tpu.memory_space<smem>>
      memref.store %60, %arg6[%c4_21] : memref<8xf32, #tpu.memory_space<smem>>
      %62 = arith.subf %22, %21 : vector<8x128xf32>
      %63 = arith.index_cast %arg1 : i32 to index
      %c0_22 = arith.constant 0 : index
      %c0_23 = arith.constant 0 : index
      %64 = vector.load %arg7[%63, %c0_22, %c0_23] : memref<1x8x128xf32, #tpu.memory_space<vmem>>, vector<1x8x128xf32>
      %65 = vector.shape_cast %64 : vector<1x8x128xf32> to vector<8x128xf32>
      %66 = vector.shape_cast %62 : vector<8x128xf32> to vector<1x8x128xf32>
      tpu.vector_store %arg7[%63, %c0_22, %c0_23], %66 {strides = array<i32>} : memref<1x8x128xf32, #tpu.memory_space<vmem>>, vector<1x8x128xf32>,
    } else {
    }
    %c1_i32 = arith.constant 1 : i32
    %9 = arith.cmpi eq, %arg0, %c1_i32 : i32
    %10 = arith.extui %9 : i1 to i32
    %c0_i32_5 = arith.constant 0 : i32
    %11 = arith.cmpi ne, %10, %c0_i32_5 : i32
    scf.if %11 {
      %12 = arith.index_cast %arg1 : i32 to index
      %c0_6 = arith.constant 0 : index
      %c0_7 = arith.constant 0 : index
      %13 = vector.load %arg7[%12, %c0_6, %c0_7] : memref<1x8x128xf32, #tpu.memory_space<vmem>>, vector<1x8x128xf32>
      %14 = vector.shape_cast %13 : vector<1x8x128xf32> to vector<8x128xf32>
      %cst = arith.constant 0.000000e+00 : f32
      %15 = vector.broadcast %cst : f32 to vector<8x128xf32>
      %16 = arith.cmpf olt, %14, %15 : vector<8x128xf32>
      %cst_8 = arith.constant 0.000000e+00 : f32
      %17 = vector.broadcast %cst_8 : f32 to vector<8x128xf32>
      %18 = arith.cmpf ogt, %14, %17 : vector<8x128xf32>
      %19 = math.absf %14 : vector<8x128xf32>
      %cst_9 = arith.constant 0.000000e+00 : f32
      %20 = vector.broadcast %cst_9 : f32 to vector<8x128xf32>
      %21 = arith.select %16, %19, %20 : vector<8x128xi1>, vector<8x128xf32>
      %cst_10 = arith.constant 0.000000e+00 : f32
      %22 = vector.broadcast %cst_10 : f32 to vector<8x128xf32>
      %23 = arith.select %18, %19, %22 : vector<8x128xi1>, vector<8x128xf32>
      %c0_11 = arith.constant 0 : index
      %24 = memref.load %arg6[%c0_11] : memref<8xf32, #tpu.memory_space<smem>>
      %c1 = arith.constant 1 : index
      %25 = memref.load %arg6[%c1] : memref<8xf32, #tpu.memory_space<smem>>
      %c3 = arith.constant 3 : index
      %26 = memref.load %arg6[%c3] : memref<8xf32, #tpu.memory_space<smem>>
      %cst_12 = arith.constant 5.000000e-01 : f32
      %27 = arith.divf %cst_12, %26 : f32
      %c4 = arith.constant 4 : index
      %28 = memref.load %arg6[%c4] : memref<8xf32, #tpu.memory_space<smem>>
      %cst_13 = arith.constant 5.000000e-01 : f32
      %29 = arith.divf %cst_13, %28 : f32
      %cst_14 = arith.constant dense<0.000000e+00> : vector<8xf32>
      %30 = vector.multi_reduction <add>, %21, %cst_14 [1] : vector<8x128xf32> to vector<8xf32>
      %31 = vector.shape_cast %30 : vector<8xf32> to vector<8x1xf32>
      %cst_15 = arith.constant dense<0.000000e+00> : vector<8xf32>
      %32 = vector.multi_reduction <add>, %23, %cst_15 [1] : vector<8x128xf32> to vector<8xf32>
      %33 = vector.shape_cast %32 : vector<8xf32> to vector<8x1xf32>
      %34 = vector.broadcast %27 : f32 to vector<8x128xf32>
      %35 = vector.broadcast %29 : f32 to vector<8x128xf32>
      %36 = arith.select %16, %34, %35 : vector<8x128xi1>, vector<8x128xf32>
      %37 = vector.broadcast %0 : vector<1x128xf32> to vector<8x128xf32>
      %38 = arith.mulf %37, %36 : vector<8x128xf32>
      %39 = vector.broadcast %24 : f32 to vector<8x1xf32>
      %40 = arith.addf %33, %39 : vector<8x1xf32>
      %41 = vector.broadcast %25 : f32 to vector<8x1xf32>
      %42 = arith.addf %31, %41 : vector<8x1xf32>
      %43 = vector.shape_cast %40 : vector<8x1xf32> to vector<8x1xf32>
      %44 = vector.broadcast %43 : vector<8x1xf32> to vector<8x128xf32>
      %45 = vector.shape_cast %42 : vector<8x1xf32> to vector<8x1xf32>
      %46 = vector.broadcast %45 : vector<8x1xf32> to vector<8x128xf32>
      %47 = arith.select %16, %44, %46 : vector<8x128xi1>, vector<8x128xf32>
      %48 = arith.subf %47, %19 : vector<8x128xf32>
      %49 = arith.subf %19, %38 : vector<8x128xf32>
      %50 = math.exp %49 : vector<8x128xf32>
      %51 = arith.addf %50, %48 : vector<8x128xf32>
      %52 = math.log %51 : vector<8x128xf32>
      %cst_16 = arith.constant 1.000000e+00 : f32
      %53 = vector.broadcast %cst_16 : f32 to vector<8x128xf32>
      %54 = arith.select %18, %48, %53 : vector<8x128xi1>, vector<8x128xf32>
      %55 = arith.subf %52, %49 : vector<8x128xf32>
      %cst_17 = arith.constant 0.000000e+00 : f32
      %56 = vector.broadcast %cst_17 : f32 to vector<8x128xf32>
      %57 = arith.select %16, %55, %56 : vector<8x128xi1>, vector<8x128xf32>
      %58 = math.log %54 : vector<8x128xf32>
      %59 = arith.subf %52, %58 : vector<8x128xf32>
      %cst_18 = arith.constant 0.000000e+00 : f32
      %60 = vector.broadcast %cst_18 : f32 to vector<8x128xf32>
      %61 = arith.select %18, %59, %60 : vector<8x128xi1>, vector<8x128xf32>
      %c5 = arith.constant 5 : index
      %62 = memref.load %arg6[%c5] : memref<8xf32, #tpu.memory_space<smem>>
      %63 = vector.shape_cast %57 : vector<8x128xf32> to vector<1x8x128xf32>
      %cst_19 = arith.constant dense<0.000000e+00> : vector<1xf32>
      %64 = vector.multi_reduction <add>, %63, %cst_19 [1, 2] : vector<1x8x128xf32> to vector<1xf32>
      %65 = vector.shape_cast %64 : vector<1xf32> to vector<1x1x1xf32>
      %66 = vector.extract %65[0, 0, 0] : f32 from vector<1x1x1xf32>
      %67 = arith.addf %62, %66 : f32
      %c5_20 = arith.constant 5 : index
      %68 = memref.load %arg6[%c5_20] : memref<8xf32, #tpu.memory_space<smem>>
      memref.store %67, %arg6[%c5_20] : memref<8xf32, #tpu.memory_space<smem>>
      %c6 = arith.constant 6 : index
      %69 = memref.load %arg6[%c6] : memref<8xf32, #tpu.memory_space<smem>>
      %70 = vector.shape_cast %61 : vector<8x128xf32> to vector<1x8x128xf32>
      %cst_21 = arith.constant dense<0.000000e+00> : vector<1xf32>
      %71 = vector.multi_reduction <add>, %70, %cst_21 [1, 2] : vector<1x8x128xf32> to vector<1xf32>
      %72 = vector.shape_cast %71 : vector<1xf32> to vector<1x1x1xf32>
      %73 = vector.extract %72[0, 0, 0] : f32 from vector<1x1x1xf32>
      %74 = arith.addf %69, %73 : f32
      %c6_22 = arith.constant 6 : index
      %75 = memref.load %arg6[%c6_22] : memref<8xf32, #tpu.memory_space<smem>>
      memref.store %74, %arg6[%c6_22] : memref<8xf32, #tpu.memory_space<smem>>
      %c0_i32_23 = arith.constant 0 : i32
      %76 = arith.cmpi eq, %arg1, %c0_i32_23 : i32
      %77 = arith.extui %76 : i1 to i32
      %c0_i32_24 = arith.constant 0 : i32
      %78 = arith.cmpi ne, %77, %c0_i32_24 : i32
      scf.if %78 {
        %c2 = arith.constant 2 : index
        %79 = memref.load %arg6[%c2] : memref<8xf32, #tpu.memory_space<smem>>
        %cst_25 = arith.constant 1.024000e+03 : f32
        %80 = arith.subf %cst_25, %79 : f32
        %c5_26 = arith.constant 5 : index
        %81 = memref.load %arg6[%c5_26] : memref<8xf32, #tpu.memory_space<smem>>
        %82 = arith.divf %81, %79 : f32
        %c6_27 = arith.constant 6 : index
        %83 = memref.load %arg6[%c6_27] : memref<8xf32, #tpu.memory_space<smem>>
        %84 = arith.divf %83, %80 : f32
        %85 = arith.addf %82, %84 : f32
        %c0_28 = arith.constant 0 : index
        %86 = memref.load %arg5[%c0_28] : memref<1xf32, #tpu.memory_space<smem>>
        memref.store %85, %arg5[%c0_28] : memref<1xf32, #tpu.memory_space<smem>>
      } else {
      }
    } else {
    }
    return
  }
  func.func @transform_0(%arg0: i32, %arg1: i32) -> (i32, i32) {
    %c1_i32 = arith.constant 1 : i32
    %0 = arith.subi %c1_i32, %arg0 : i32
    %1 = arith.muli %0, %arg1 : i32
    %c0_i32 = arith.constant 0 : i32
    %c0_i32_0 = arith.constant 0 : i32
    return %1, %c0_i32 : i32, i32
  }
  func.func @transform_1(%arg0: i32, %arg1: i32) -> (i32, i32) {
    %c1_i32 = arith.constant 1 : i32
    %0 = arith.subi %c1_i32, %arg0 : i32
    %1 = arith.muli %0, %arg1 : i32
    %c0_i32 = arith.constant 0 : i32
    %c0_i32_0 = arith.constant 0 : i32
    return %1, %c0_i32 : i32, i32
  }
  func.func @transform_2(%arg0: i32, %arg1: i32) -> (i32, i32) {
    %c0_i32 = arith.constant 0 : i32
    %c0_i32_0 = arith.constant 0 : i32
    %c0_i32_1 = arith.constant 0 : i32
    return %c0_i32, %c0_i32_0 : i32, i32
  }
  func.func @transform_3(%arg0: i32, %arg1: i32) -> i32 {
    %c0_i32 = arith.constant 0 : i32
    %c0_i32_0 = arith.constant 0 : i32
    return %c0_i32 : i32
  }
}

</mosaic_0001>

<llo_original>
// kernel: tpu_custom_call.1
$region0: #{tpu_custom_call.1}
  #allocation0 [shape = 'u32[]', space=smem, size = 0x4, offset = 0x4, fixed_abs, tag = 'smem constant byte address 0x4 - core index']
  #allocation1 [shape = 'u32[144,128]{1,0:T(1,128)}', space=vmem, size = 0x12000, scoped, tag = 'internal scratch']
  #allocation2 [shape = 'f32[8]{0:T(128)}', space=smem, size = 0x200, scoped, tag = 'scratch operand']
  #allocation3 [shape = 'f32[1,8,128]{2,1,0:T(8,128)}', space=vmem, size = 0x1000, scoped, tag = 'scratch operand']
  %s0 = inlined_call_operand.hbm [shape: f32[8,128], index: 0, kind: input, shape index: {}]
  %s1 = inlined_call_operand.hbm [shape: f32[8,128], index: 1, kind: input, shape index: {}]
  %s2 = inlined_call_operand.vmem [shape: f32[1,128], index: 2, kind: input, shape index: {}]
  %s3 = inlined_call_operand.hbm [shape: f32[1], index: 3, kind: output, shape index: {}]
  %s4 = sld [smem:[#allocation0]]
  $region69: #{tpu_custom_call.1} parent=0
    _
  %s6 = ssub.s32 1, %s4
  %s7 = scalar_select 0, %s6, %s4
  $region1: #{tpu_custom_call.1} parent=0
    #allocation4 [shape = 'u8[8192]{0}', space=vmem, size = 0x2000, scoped, tag = 'input window, operand 0']
    #allocation5 [shape = 's32[2]{0}', space=sflag, size = 0x8, scoped, tag = 'scoped memory for tpu_custom_call.1']
    #allocation6 [shape = 's32[2]{0}', space=sflag, size = 0x8, scoped, tag = 'scoped memory for tpu_custom_call.1']
    #allocation7 [shape = 'u8[8192]{0}', space=vmem, size = 0x2000, scoped, tag = 'input window, operand 1']
    #allocation8 [shape = 's32[2]{0}', space=sflag, size = 0x8, scoped, tag = 'scoped memory for tpu_custom_call.1']
    #allocation9 [shape = 'u8[512]{0}', space=smem, size = 0x200, scoped, tag = 'output window, operand 0, single buffered']
    %8 = vsyncpa [#allocation5], 0
    %s9 = scalar_lea.sflag [#allocation5], 1
    %10 = vsyncpa %s9, 0
    %11 = vsyncpa [#allocation8], 0
    %s12 = scalar_lea.sflag [#allocation8], 1
    %13 = vsyncpa %s12, 0
    %14 = vsyncpa [#allocation6], 0
    loop: start=0, step=1, limit=4
    $region2: #{tpu_custom_call.1} parent=1 // loop_pre_header
      _
    $region3: #{tpu_custom_call.1} parent=1 // loop_header
      %s16 = sphi 0, %s20
      %p17 = scmp.ge.s32.totalorder %s16, 4
      %s23 = sphi 0, %s35
      %s24 = sphi 0, %s31
      %s25 = sphi 0, %s23
      %s26 = sphi 0, %s24
      %s27 = sphi 0, %s25
      %s28 = sphi 0, %s26
      %s42 = sphi 0, %s44
      %s45 = sphi 0, %s42
      %s46 = sphi 0, %s45
      %s62 = sphi 0, %s46
      %s72 = sphi 0, %s74
      %s75 = sphi 0, %s72
      %s76 = sphi 0, %s75
      %s92 = sphi 0, %s76
      %s96 = sphi 0, %s96
      %s98 = sphi 0, %s96
      %s99 = sphi 0, %s98
      %s113 = sphi 0, %s99
      %s117 = sphi 0, %s117
      %s119 = sphi 0, %s117
      %s120 = sphi 0, %s119
      %s134 = sphi 0, %s120
    $region4: #{tpu_custom_call.1} parent=1 // loop_header_branch
      %19 = sbr.rel (%p17) target = $region8
    $region5: #{tpu_custom_call.1} parent=1 // loop_body
      %s21 = ssub.s32 %s16, 1
      %s22 = ssub.s32 %s16, 2
      %s29 = sadd.s32 1, %s24
      %p30 = scmp.ge.s32.totalorder %s29, 1
      %s31 = scalar_select %p30, 0, %s29
      %s32 = sadd.s32 1, %s23
      %s33 = scalar_select %p30, %s32, %s23
      %p34 = scmp.ge.s32.totalorder %s33, 2
      %s35 = scalar_select %p34, 0, %s33
      %s36 = ssub.s32 1, %s23
      %s37 = smul.u32 %s36, %s24
      %s38 = ssub.s32 1, %s35
      %s39 = smul.u32 %s38, %s31
      %s40 = ssub.s32 %s37, %s39
      %p41 = scmp.eq.s32.totalorder %s40, 0
      %s43 = sadd.s32 %s42, 1
      %s44 = scalar_select %p41, %s42, %s43
      %p47 = pneg %p41
      %p48 = scmp.eq.s32.totalorder %s16, 1
      %p49 = por %p47, %p48
      %p50 = scmp.ne.s32.totalorder %s42, %s45
      %p51 = scmp.eq.s32.totalorder %s16, 0
      %p52 = por %p50, %p51
      %p53 = scmp.ne.s32.totalorder %s42, %s45
      %p54 = scmp.eq.s32.totalorder %s21, 1
      %p55 = por %p53, %p54
      %p56 = scmp.ne.s32.totalorder %s45, %s46
      %p57 = scmp.eq.s32.totalorder %s21, 0
      %p58 = por %p56, %p57
      %p59 = scmp.ne.s32.totalorder %s45, %s46
      %p60 = scmp.eq.s32.totalorder %s22, 1
      %p61 = por %p59, %p60
      %p63 = scmp.ne.s32.totalorder %s46, %s62
      %p64 = scmp.eq.s32.totalorder %s22, 0
      %p65 = por %p63, %p64
      %s66 = ssub.s32 1, %s23
      %s67 = smul.u32 %s66, %s24
      %s68 = ssub.s32 1, %s35
      %s69 = smul.u32 %s68, %s31
      %s70 = ssub.s32 %s67, %s69
      %p71 = scmp.eq.s32.totalorder %s70, 0
      %s73 = sadd.s32 %s72, 1
      %s74 = scalar_select %p71, %s72, %s73
      %p77 = pneg %p71
      %p78 = scmp.eq.s32.totalorder %s16, 1
      %p79 = por %p77, %p78
      %p80 = scmp.ne.s32.totalorder %s72, %s75
      %p81 = scmp.eq.s32.totalorder %s16, 0
      %p82 = por %p80, %p81
      %p83 = scmp.ne.s32.totalorder %s72, %s75
      %p84 = scmp.eq.s32.totalorder %s21, 1
      %p85 = por %p83, %p84
      %p86 = scmp.ne.s32.totalorder %s75, %s76
      %p87 = scmp.eq.s32.totalorder %s21, 0
      %p88 = por %p86, %p87
      %p89 = scmp.ne.s32.totalorder %s75, %s76
      %p90 = scmp.eq.s32.totalorder %s22, 1
      %p91 = por %p89, %p90
      %p93 = scmp.ne.s32.totalorder %s76, %s92
      %p94 = scmp.eq.s32.totalorder %s22, 0
      %p95 = por %p93, %p94
      %s97 = sadd.s32 %s96, 1
      %p100 = scmp.eq.s32.totalorder %s16, 1
      %p101 = scmp.ne.s32.totalorder %s96, %s98
      %p102 = scmp.eq.s32.totalorder %s16, 0
      %p103 = por %p101, %p102
      %p104 = scmp.ne.s32.totalorder %s96, %s98
      %p105 = scmp.eq.s32.totalorder %s21, 1
      %p106 = por %p104, %p105
      %p107 = scmp.ne.s32.totalorder %s98, %s99
      %p108 = scmp.eq.s32.totalorder %s21, 0
      %p109 = por %p107, %p108
      %p110 = scmp.ne.s32.totalorder %s98, %s99
      %p111 = scmp.eq.s32.totalorder %s22, 1
      %p112 = por %p110, %p111
      %p114 = scmp.ne.s32.totalorder %s99, %s113
      %p115 = scmp.eq.s32.totalorder %s22, 0
      %p116 = por %p114, %p115
      %s118 = sadd.s32 %s117, 1
      %p121 = scmp.eq.s32.totalorder %s16, 1
      %p122 = scmp.ne.s32.totalorder %s117, %s119
      %p123 = scmp.eq.s32.totalorder %s16, 0
      %p124 = por %p122, %p123
      %p125 = scmp.ne.s32.totalorder %s117, %s119
      %p126 = scmp.eq.s32.totalorder %s21, 1
      %p127 = por %p125, %p126
      %p128 = scmp.ne.s32.totalorder %s119, %s120
      %p129 = scmp.eq.s32.totalorder %s21, 0
      %p130 = por %p128, %p129
      %p131 = scmp.ne.s32.totalorder %s119, %s120
      %p132 = scmp.eq.s32.totalorder %s22, 1
      %p133 = por %p131, %p132
      %p135 = scmp.ne.s32.totalorder %s120, %s134
      %p136 = scmp.eq.s32.totalorder %s22, 0
      %p137 = por %p135, %p136
      %p138 = scmp.le.s32.totalorder 1, %s16
      %p139 = scmp.lt.s32.totalorder %s16, 3
      %p140 = pnand %p138, %p139
      %p141 = pneg %p140
      // Predicated region
      $region9: #{tpu_custom_call.1} parent=5 // pred_check
        _
      $region10: #{tpu_custom_call.1} parent=5 // pred_check_branch
        %143 = sbr.rel (%p140) target = $region12
      $region11: #{tpu_custom_call.1} parent=5 // pred_region
        %s144 = ssub.s32 %s16, 1
        // Predicated region
        $region13: #{tpu_custom_call.1} parent=11 // pred_check
          %p145 = pneg %p109
        $region14: #{tpu_custom_call.1} parent=11 // pred_check_branch
          %147 = sbr.rel (%p145) target = $region16
        $region15: #{tpu_custom_call.1} parent=11 // pred_region
          _
        $region16: #{tpu_custom_call.1} parent=11 // pred_fallthru
          _
      $region12: #{tpu_custom_call.1} parent=5 // pred_fallthru
        _
      %p148 = scmp.lt.s32.totalorder %s16, 2
      // Predicated region
      $region17: #{tpu_custom_call.1} parent=5 // pred_check
        %p149 = pneg %p148
      $region18: #{tpu_custom_call.1} parent=5 // pred_check_branch
        %151 = sbr.rel (%p149) target = $region20
      $region19: #{tpu_custom_call.1} parent=5 // pred_region
        // Predicated region
        $region21: #{tpu_custom_call.1} parent=19 // pred_check
          %p152 = pneg %p52
        $region22: #{tpu_custom_call.1} parent=19 // pred_check_branch
          %154 = sbr.rel (%p152) target = $region24
        $region23: #{tpu_custom_call.1} parent=19 // pred_region
          %s155 = sand.u32 %s42, 1
          %s156 = scalar_lea.sflag [#allocation5], %s155
          %s157 = sand.u32 %s42, 1
          %s158 = smul.addr %s157, 8
          %s159 = scalar_lea.vmem [#allocation4], %s158
          %s160 = ssub.s32 1, %s23
          %s161 = smul.u32 %s160, %s24
          %s163 = ssub.s32 128, 128
          %164 = vsyncadd %s156, %s163
          %s165 = smul.addr %s161, 128
          %s166 = scalar_lea.hbm %s0, %s165
          %s168 = sshll.u32 %s159, 4
          %s169 = int_to_ptr.vmem [resolvable:$true] %s168
          %171 = dma.hbm_to_vmem [thread:$0]  %s166, 128, %s169, %s156
        $region24: #{tpu_custom_call.1} parent=19 // pred_fallthru
          _
        // Predicated region
        $region25: #{tpu_custom_call.1} parent=19 // pred_check
          %p172 = pneg %p82
        $region26: #{tpu_custom_call.1} parent=19 // pred_check_branch
          %174 = sbr.rel (%p172) target = $region28
        $region27: #{tpu_custom_call.1} parent=19 // pred_region
          %s175 = sand.u32 %s72, 1
          %s176 = scalar_lea.sflag [#allocation8], %s175
          %s177 = sand.u32 %s72, 1
          %s178 = smul.addr %s177, 8
          %s179 = scalar_lea.vmem [#allocation7], %s178
          %s180 = ssub.s32 1, %s23
          %s181 = smul.u32 %s180, %s24
          %s183 = ssub.s32 128, 128
          %184 = vsyncadd %s176, %s183
          %s185 = smul.addr %s181, 128
          %s186 = scalar_lea.hbm %s1, %s185
          %s188 = sshll.u32 %s179, 4
          %s189 = int_to_ptr.vmem [resolvable:$true] %s188
          %191 = dma.hbm_to_vmem [thread:$0]  %s186, 128, %s189, %s176
        $region28: #{tpu_custom_call.1} parent=19 // pred_fallthru
          _
      $region20: #{tpu_custom_call.1} parent=5 // pred_fallthru
        _
      %p192 = scmp.le.s32.totalorder 1, %s16
      %p193 = scmp.lt.s32.totalorder %s16, 3
      %p194 = pnand %p192, %p193
      %p195 = pneg %p194
      // Predicated region
      $region29: #{tpu_custom_call.1} parent=5 // pred_check
        _
      $region30: #{tpu_custom_call.1} parent=5 // pred_check_branch
        %197 = sbr.rel (%p194) target = $region32
      $region31: #{tpu_custom_call.1} parent=5 // pred_region
        %s198 = ssub.s32 %s16, 1
        %s199 = sand.u32 %s45, 1
        %s200 = scalar_lea.sflag [#allocation5], %s199
        %s201 = sand.u32 %s45, 1
        %s202 = smul.addr %s201, 8
        %s203 = scalar_lea.vmem [#allocation4], %s202
        // Predicated region
        $region33: #{tpu_custom_call.1} parent=31 // pred_check
          %p204 = pneg %p58
        $region34: #{tpu_custom_call.1} parent=31 // pred_check_branch
          %206 = sbr.rel (%p204) target = $region36
        $region35: #{tpu_custom_call.1} parent=31 // pred_region
          %207 = dma.done %s200, 128
        $region36: #{tpu_custom_call.1} parent=31 // pred_fallthru
          _
        %s208 = sand.u32 %s75, 1
        %s209 = scalar_lea.sflag [#allocation8], %s208
        %s210 = sand.u32 %s75, 1
        %s211 = smul.addr %s210, 8
        %s212 = scalar_lea.vmem [#allocation7], %s211
        // Predicated region
        $region37: #{tpu_custom_call.1} parent=31 // pred_check
          %p213 = pneg %p88
        $region38: #{tpu_custom_call.1} parent=31 // pred_check_branch
          %215 = sbr.rel (%p213) target = $region40
        $region39: #{tpu_custom_call.1} parent=31 // pred_region
          %216 = dma.done %s209, 128
        $region40: #{tpu_custom_call.1} parent=31 // pred_fallthru
          _
        %s217 = sand.u32 %s45, 1
        %s218 = scalar_lea.sflag [#allocation5], %s217
        %s219 = sand.u32 %s45, 1
        %s220 = smul.addr %s219, 8
        %s221 = scalar_lea.vmem [#allocation4], %s220
        %p222 = pneg %p58
        %p223 = pneg %p55
        %s224 = sand.u32 %s75, 1
        %s225 = scalar_lea.sflag [#allocation8], %s224
        %s226 = sand.u32 %s75, 1
        %s227 = smul.addr %s226, 8
        %s228 = scalar_lea.vmem [#allocation7], %s227
        %p229 = pneg %p88
        %p230 = pneg %p85
        %p231 = pneg %p109
        %p232 = pneg %p106
        %p233 = pneg %p130
        %p234 = pneg %p127
        %s235 = ssub.s32 1, %s25
        %s236 = smul.u32 %s235, %s26
        %s237 = ssub.s32 1, %s25
        %s238 = smul.u32 %s237, %s26
        %v239 = vld [vmem:[%s2] sm:$0x1]
        %p240 = scmp.eq.s32.totalorder %s25, 0
        %p241 = scmp.eq.s32.totalorder %s26, 0
        %p242 = pnand %p240, %p241
        %p243 = pneg %p242
        // Predicated region
        $region41: #{tpu_custom_call.1} parent=31 // pred_check
          _
        $region42: #{tpu_custom_call.1} parent=31 // pred_check_branch
          %245 = sbr.rel (%p242) target = $region44
        $region43: #{tpu_custom_call.1} parent=31 // pred_region
          %s246 = scalar_lea.smem [#allocation2], 0
          %247 = sst [smem:[%s246]] 0.0
          %s248 = scalar_lea.smem [#allocation2], 1
          %249 = sst [smem:[%s248]] 0.0
          %s250 = scalar_lea.smem [#allocation2], 2
          %251 = sst [smem:[%s250]] 0.0
          %s252 = scalar_lea.smem [#allocation2], 3
          %253 = sst [smem:[%s252]] 0.0
          %s254 = scalar_lea.smem [#allocation2], 4
          %255 = sst [smem:[%s254]] 0.0
          %s256 = scalar_lea.smem [#allocation2], 5
          %257 = sst [smem:[%s256]] 0.0
          %s258 = scalar_lea.smem [#allocation2], 6
          %259 = sst [smem:[%s258]] 0.0
        $region44: #{tpu_custom_call.1} parent=31 // pred_fallthru
          _
        // Predicated region
        $region45: #{tpu_custom_call.1} parent=31 // pred_check
          %p260 = pneg %p240
        $region46: #{tpu_custom_call.1} parent=31 // pred_check_branch
          %262 = sbr.rel (%p260) target = $region48
        $region47: #{tpu_custom_call.1} parent=31 // pred_region
          %v263 = vld [vmem:[%s203] sm:$0xff]
          %v264 = vld [vmem:[%s212] sm:$0xff]
          %v265 = vsub.f32 1.0, %v264
          %v266 = vxor.u32 %v263, 2147483648
          %v267 = vmul.f32 %v266, 1.442695
          %v268 = vpow.pop %v267
          %v269 = vadd.f32 %v268, 1.0
          %v270 = vrcp.pop %v269
          %v271 = vmul.f32 1.0, %v270
          %v272 = vmul.f32 %v271, %v264
          %v273 = vmul.f32 %v271, %v265
          %s274 = sld [smem:[#allocation2]]
          %275 = vadd.xlane.f32.xlu0 %v272
          %v276 = vpop.xlane.xlu0 %275
          %v277 = vrot.slane %v276, 4
          %v278 = vadd.f32 %v276, %v277
          %v279 = vrot.slane %v278, 2
          %v280 = vadd.f32 %v278, %v279
          %v281 = vrot.slane %v280, 1
          %v282 = vadd.f32 %v280, %v281
          %s283 = vtos %v282
          %s284 = sadd.f32 %s274, %s283
          %s285 = scalar_lea.smem [#allocation2], 0
          %286 = sst [smem:[%s285]] %s284
          %s287 = sld [smem:[#allocation2 + $0x1]]
          %288 = vadd.xlane.f32.xlu0 %v273
          %v289 = vpop.xlane.xlu0 %288
          %v290 = vrot.slane %v289, 4
          %v291 = vadd.f32 %v289, %v290
          %v292 = vrot.slane %v291, 2
          %v293 = vadd.f32 %v291, %v292
          %v294 = vrot.slane %v293, 1
          %v295 = vadd.f32 %v293, %v294
          %s296 = vtos %v295
          %s297 = sadd.f32 %s287, %s296
          %s298 = scalar_lea.smem [#allocation2], 1
          %299 = sst [smem:[%s298]] %s297
          %s300 = sld [smem:[#allocation2 + $0x2]]
          %301 = vadd.xlane.f32.xlu0 %v264
          %v302 = vpop.xlane.xlu0 %301
          %v303 = vrot.slane %v302, 4
          %v304 = vadd.f32 %v302, %v303
          %v305 = vrot.slane %v304, 2
          %v306 = vadd.f32 %v304, %v305
          %v307 = vrot.slane %v306, 1
          %v308 = vadd.f32 %v306, %v307
          %s309 = vtos %v308
          %s310 = sadd.f32 %s300, %s309
          %s311 = scalar_lea.smem [#allocation2], 2
          %312 = sst [smem:[%s311]] %s310
          %s313 = sld [smem:[#allocation2 + $0x3]]
          %v315 = vlaneseq
          %v316 = vshrl.u32 %v315, 7
          %v317 = vsub.s32 0, %v316
          %v318 = vrot.slane %v239, %v317
          %v320 = vmul.f32 %v318, %v264
          %321 = vmax.xlane.f32.xlu0 %v320
          %v322 = vpop.xlane.xlu0 %321
          %v323 = vrot.slane %v322, 4
          %v324 = vmax.f32 %v322, %v323
          %v325 = vrot.slane %v324, 2
          %v326 = vmax.f32 %v324, %v325
          %v327 = vrot.slane %v326, 1
          %v328 = vmax.f32 %v326, %v327
          %s329 = vtos %v328
          %s330 = smax.f32 %s313, %s329
          %s331 = scalar_lea.smem [#allocation2], 3
          %332 = sst [smem:[%s331]] %s330
          %s333 = sld [smem:[#allocation2 + $0x4]]
          %v334 = vmul.f32 %v318, %v265
          %335 = vmax.xlane.f32.xlu0 %v334
          %v336 = vpop.xlane.xlu0 %335
          %v337 = vrot.slane %v336, 4
          %v338 = vmax.f32 %v336, %v337
          %v339 = vrot.slane %v338, 2
          %v340 = vmax.f32 %v338, %v339
          %v341 = vrot.slane %v340, 1
          %v342 = vmax.f32 %v340, %v341
          %s343 = vtos %v342
          %s344 = smax.f32 %s333, %s343
          %s345 = scalar_lea.smem [#allocation2], 4
          %346 = sst [smem:[%s345]] %s344
          %v347 = vsub.f32 %v273, %v272
          %s348 = smul.u32 %s26, 8
          %s349 = scalar_lea.vmem [#allocation3], %s348
          %350 = vst [vmem:[%s349] sm:$0xff] %v347
        $region48: #{tpu_custom_call.1} parent=31 // pred_fallthru
          _
        %p351 = scmp.eq.s32.totalorder %s25, 1
        // Predicated region
        $region49: #{tpu_custom_call.1} parent=31 // pred_check
          %p352 = pneg %p351
        $region50: #{tpu_custom_call.1} parent=31 // pred_check_branch
          %354 = sbr.rel (%p352) target = $region52
        $region51: #{tpu_custom_call.1} parent=31 // pred_region
          %s355 = smul.u32 %s26, 8
          %s356 = scalar_lea.vmem [#allocation3], %s355
          %v357 = vld [vmem:[%s356] sm:$0xff]
          %vm358 = vcmp.lt.f32.partialorder %v357, 0.0
          %vm359 = vcmp.gt.f32.partialorder %v357, 0.0
          %v360 = vand.u32 2147483647, %v357
          %v361 = vsel %vm358, %v360, 0.0
          %v362 = vsel %vm359, %v360, 0.0
          %s363 = sld [smem:[#allocation2]]
          %s364 = sld [smem:[#allocation2 + $0x1]]
          %s365 = sld [smem:[#allocation2 + $0x3]]
          %v366 = vstv %s365
          %v367 = vrcp.pop %v366
          %s368 = vtos %v367
          %s369 = smul.f32 0.5, %s368
          %s370 = sld [smem:[#allocation2 + $0x4]]
          %v371 = vstv %s370
          %v372 = vrcp.pop %v371
          %s373 = vtos %v372
          %s374 = smul.f32 0.5, %s373
          %375 = vadd.xlane.f32.xlu0 %v361
          %v376 = vpop.xlane.xlu0 %375
          %377 = vadd.xlane.f32.xlu0 %v362
          %v378 = vpop.xlane.xlu0 %377
          %v379 = vstv %s369
          %v380 = vstv %s374
          %v381 = vsel %vm358, %v379, %v380
          %v383 = vlaneseq
          %v384 = vshrl.u32 %v383, 7
          %v385 = vsub.s32 0, %v384
          %v386 = vrot.slane %v239, %v385
          %v388 = vmul.f32 %v386, %v381
          %v389 = vstv %s363
          %v390 = vadd.f32 %v378, %v389
          %v391 = vstv %s364
          %v392 = vadd.f32 %v376, %v391
          %v393 = vsel %vm358, %v390, %v392
          %v394 = vsub.f32 %v393, %v360
          %v395 = vsub.f32 %v360, %v388
          %v396 = vmul.f32 %v395, 1.442695
          %v397 = vpow.pop %v396
          %v398 = vadd.f32 %v397, %v394
          %v399 = vlog2.pop %v398
          %v400 = vmul.f32 %v399, 0.6931472
          %v401 = vsel %vm359, %v394, 1.0
          %v402 = vsub.f32 %v400, %v395
          %v403 = vsel %vm358, %v402, 0.0
          %v404 = vlog2.pop %v401
          %v405 = vmul.f32 %v404, 0.6931472
          %v406 = vsub.f32 %v400, %v405
          %v407 = vsel %vm359, %v406, 0.0
          %s408 = sld [smem:[#allocation2 + $0x5]]
          %409 = vadd.xlane.f32.xlu0 %v403
          %v410 = vpop.xlane.xlu0 %409
          %v411 = vrot.slane %v410, 4
          %v412 = vadd.f32 %v410, %v411
          %v413 = vrot.slane %v412, 2
          %v414 = vadd.f32 %v412, %v413
          %v415 = vrot.slane %v414, 1
          %v416 = vadd.f32 %v414, %v415
          %s417 = vtos %v416
          %s418 = sadd.f32 %s408, %s417
          %s419 = scalar_lea.smem [#allocation2], 5
          %420 = sst [smem:[%s419]] %s418
          %s421 = sld [smem:[#allocation2 + $0x6]]
          %422 = vadd.xlane.f32.xlu0 %v407
          %v423 = vpop.xlane.xlu0 %422
          %v424 = vrot.slane %v423, 4
          %v425 = vadd.f32 %v423, %v424
          %v426 = vrot.slane %v425, 2
          %v427 = vadd.f32 %v425, %v426
          %v428 = vrot.slane %v427, 1
          %v429 = vadd.f32 %v427, %v428
          %s430 = vtos %v429
          %s431 = sadd.f32 %s421, %s430
          %s432 = scalar_lea.smem [#allocation2], 6
          %433 = sst [smem:[%s432]] %s431
          // Predicated region
          $region53: #{tpu_custom_call.1} parent=51 // pred_check
            %p434 = pneg %p241
          $region54: #{tpu_custom_call.1} parent=51 // pred_check_branch
            %436 = sbr.rel (%p434) target = $region56
          $region55: #{tpu_custom_call.1} parent=51 // pred_region
            %s437 = sld [smem:[#allocation2 + $0x2]]
            %s438 = ssub.f32 1024.0, %s437
            %s439 = sld [smem:[#allocation2 + $0x5]]
            %v440 = vstv %s437
            %v441 = vrcp.pop %v440
            %s442 = vtos %v441
            %s443 = smul.f32 %s439, %s442
            %s444 = sld [smem:[#allocation2 + $0x6]]
            %v445 = vstv %s438
            %v446 = vrcp.pop %v445
            %s447 = vtos %v446
            %s448 = smul.f32 %s444, %s447
            %s449 = sadd.f32 %s443, %s448
            %s450 = scalar_lea.smem [#allocation9], 0
            %451 = sst [smem:[%s450]] %s449
          $region56: #{tpu_custom_call.1} parent=51 // pred_fallthru
            _
        $region52: #{tpu_custom_call.1} parent=31 // pred_fallthru
          _
        // Predicated region
        $region57: #{tpu_custom_call.1} parent=31 // pred_check
          %p452 = pneg %p127
        $region58: #{tpu_custom_call.1} parent=31 // pred_check_branch
          %454 = sbr.rel (%p452) target = $region60
        $region59: #{tpu_custom_call.1} parent=31 // pred_region
          %s456 = ssub.s32 16, 16
          %457 = vsyncadd [#allocation6], %s456
          %460 = dma.smem_to_hbm [#allocation9], 16, %s3, [#allocation6]
        $region60: #{tpu_custom_call.1} parent=31 // pred_fallthru
          _
        // Predicated region
        $region61: #{tpu_custom_call.1} parent=31 // pred_check
          %p461 = pneg %p127
        $region62: #{tpu_custom_call.1} parent=31 // pred_check_branch
          %463 = sbr.rel (%p461) target = $region64
        $region63: #{tpu_custom_call.1} parent=31 // pred_region
          %464 = dma.done [#allocation6], 16
        $region64: #{tpu_custom_call.1} parent=31 // pred_fallthru
          _
        %465 = sfence
      $region32: #{tpu_custom_call.1} parent=5 // pred_fallthru
        _
      %p466 = scmp.le.s32.totalorder 2, %s16
      // Predicated region
      $region65: #{tpu_custom_call.1} parent=5 // pred_check
        %p467 = pneg %p466
      $region66: #{tpu_custom_call.1} parent=5 // pred_check_branch
        %469 = sbr.rel (%p467) target = $region68
      $region67: #{tpu_custom_call.1} parent=5 // pred_region
        %s470 = ssub.s32 %s16, 2
      $region68: #{tpu_custom_call.1} parent=5 // pred_fallthru
        _
    $region6: #{tpu_custom_call.1} parent=1 // loop_footer
      %s20 = sadd.s32 1, %s16
    $region7: #{tpu_custom_call.1} parent=1 // loop_footer_branch
      %15 = sbr.rel target = $region3
    $region8: #{tpu_custom_call.1} parent=1 // loop_exit
      _
    %471 = vsyncpa [#allocation5], 1
    %s472 = scalar_lea.sflag [#allocation5], 1
    %473 = vsyncpa %s472, 1
    %474 = vsyncpa [#allocation8], 1
    %s475 = scalar_lea.sflag [#allocation8], 1
    %476 = vsyncpa %s475, 1
    %477 = vsyncpa [#allocation6], 1
    %s478 = scalar_lea.sflag [#allocation6], 1
    %479 = vsyncpa %s478, 1

</llo_original>
